<compile_context>
chip_gen: v7x
topology: tpu7x:2x2x1
jax: 0.10.0
libtpu: 0.0.40
codegen_flags: <defaults>
</compile_context>

<pallas_src>
import jax
import jax.numpy as jnp
from jax.experimental import pallas as pl
from jax.experimental.pallas import tpu as pltpu


def _choose_tiles(N: int, C: int, E: int, HW: int, itemsize: int):
    """Pick (B_blk, HW_blk) tile sizes."""
    # Lane (HW) tiling: multiple of 128 when HW is large, else the full dim
    # (a full-extent last block dim always satisfies the (8,128) rule).
    if HW > 2048:
        hw_blk = 2048
    else:
        hw_blk = HW
    n_hw_steps = -(-HW // hw_blk)

    # Batch tiling from a conservative VMEM budget: one (in + out) block
    # <= ~4 MiB, so 2x double-buffering + the tiny embedding tile stays well
    # under v5e's 16 MiB scoped default and v7x's 64 MiB physical VMEM.
    budget = 4 << 20
    per_sample = (C + (C + E)) * hw_blk * itemsize + E * itemsize
    b_blk = max(1, min(N, budget // max(per_sample, 1)))

    # Keep >= ~8 total grid steps (>= 4 per v7x TensorCore) when the problem
    # allows, so software pipelining never collapses to one step per core.
    target_total_steps = 8
    target_batch_steps = max(1, -(-target_total_steps // n_hw_steps))
    b_blk = min(b_blk, max(1, -(-N // target_batch_steps)))
    return b_blk, hw_blk


def _make_kernel(C: int, E: int, B_blk: int, HW_blk: int):
    def kernel(x_ref, emb_ref, o_ref):
        # x_ref:   (B_blk, C,   HW_blk)   current x tile
        # emb_ref: (B_blk, E,   1)        this tile's embedding rows
        # o_ref:   (B_blk, C+E, HW_blk)   current output tile
        # First C channels: straight copy of x.
        o_ref[:, :C, :] = x_ref[...]
        # Remaining E channels: lane-broadcast the embedding column over HW.
        emb = emb_ref[...].astype(o_ref.dtype)                    # (B_blk, E, 1)
        o_ref[:, C:, :] = jnp.broadcast_to(emb, (B_blk, E, HW_blk))

    return kernel


def cat_embedding(x: jax.Array, embedding: jax.Array) -> jax.Array:
    """x: (N, C, H, W), embedding: (N, E) -> (N, C+E, H, W)."""
    N, C, H, W = x.shape
    _, E = embedding.shape
    HW = H * W

    # Lane-dense layout: flatten spatial dims (contiguous reshape, free).
    x3 = x.reshape(N, C, HW)
    # Embedding pre-shaped so E lands on sublanes like the output slab.
    emb3 = embedding.reshape(N, E, 1)

    B_blk, HW_blk = _choose_tiles(N, C, E, HW, x.dtype.itemsize)
    grid = (pl.cdiv(N, B_blk), pl.cdiv(HW, HW_blk))

    kernel = _make_kernel(C, E, B_blk, HW_blk)

    out3 = pl.pallas_call(
        kernel,
        out_shape=jax.ShapeDtypeStruct((N, C + E, HW), x.dtype),
        grid_spec=pltpu.PrefetchScalarGridSpec(
            num_scalar_prefetch=0,
            grid=grid,
            in_specs=[
                # Batched, lane-dense x tile.
                pl.BlockSpec((B_blk, C, HW_blk), lambda b, h: (b, 0, h)),
                # Per-step embedding tile for this batch block; same block
                # across the HW axis so it is fetched once per batch tile.
                pl.BlockSpec((B_blk, E, 1), lambda b, h: (b, 0, 0)),
            ],
            out_specs=pl.BlockSpec((B_blk, C + E, HW_blk), lambda b, h: (b, 0, h)),
        ),
        compiler_params=pltpu.CompilerParams(
            dimension_semantics=("parallel", "parallel"),
            vmem_limit_bytes=48 << 20,  # headroom on v7x (64 MiB physical)
        ),
    )(x3, emb3)

    return out3.reshape(N, C + E, H, W)


def cat_embedding_ref(x: jax.Array, embedding: jax.Array) -> jax.Array:
    N, C, H, W = x.shape
    expanded = jnp.broadcast_to(embedding[:, :, None, None],
                                (N, embedding.shape[1], H, W)).astype(x.dtype)
    return jnp.concatenate((x, expanded), axis=1)


if __name__ == "__main__":
    key = jax.random.PRNGKey(0)
    kx, ke = jax.random.split(key)

    N, C, H, W = 2, 4, 16, 16
    E = 8  # embedding width

    x = jax.random.normal(kx, (N, C, H, W), dtype=jnp.float32)
    embedding = jax.random.normal(ke, (N, E), dtype=jnp.float32)

    out = cat_embedding(x, embedding)
    out = jax.block_until_ready(out)

    ref = cat_embedding_ref(x, embedding)
    assert out.shape == (N, C + E, H, W), out.shape
    assert out.dtype == x.dtype
    assert jnp.allclose(out, ref), "mismatch vs reference"

    print("KERNEL_OK")
</pallas_src>

<mosaic_0001>
module attributes {stable_mosaic.version = 11 : i64} {
  func.func @kernel(%arg0: i32, %arg1: i32, %arg2: memref<1x4x256xf32, #tpu.memory_space<vmem>>, %arg3: memref<1x8x1xf32, #tpu.memory_space<vmem>>, %arg4: memref<1x12x256xf32, #tpu.memory_space<vmem>>) attributes {dimension_semantics = [#tpu.dimension_semantics<parallel>, #tpu.dimension_semantics<parallel>], iteration_bounds = array<i64: 2, 1>, scalar_prefetch = 0 : i64, scratch_operands = 0 : i64, tpu.core_type = #tpu.core_type<tc>, window_params = [{transform_indices = @transform_0, window_bounds = array<i64: 1, 4, 256>}, {transform_indices = @transform_1, window_bounds = array<i64: 1, 8, 1>}, {transform_indices = @transform_2, window_bounds = array<i64: 1, 12, 256>}]} {
    %c0 = arith.constant 0 : index
    %c0_0 = arith.constant 0 : index
    %c0_1 = arith.constant 0 : index
    %0 = vector.load %arg2[%c0, %c0_0, %c0_1] : memref<1x4x256xf32, #tpu.memory_space<vmem>>, vector<1x4x256xf32>
    %c0_2 = arith.constant 0 : index
    %c0_3 = arith.constant 0 : index
    %c0_4 = arith.constant 0 : index
    %1 = vector.load %arg4[%c0_2, %c0_3, %c0_4] : memref<1x12x256xf32, #tpu.memory_space<vmem>>, vector<1x4x256xf32>
    tpu.vector_store %arg4[%c0_2, %c0_3, %c0_4], %0 {strides = array<i32>} : memref<1x12x256xf32, #tpu.memory_space<vmem>>, vector<1x4x256xf32>,
    %c0_5 = arith.constant 0 : index
    %c0_6 = arith.constant 0 : index
    %c0_7 = arith.constant 0 : index
    %2 = vector.load %arg3[%c0_5, %c0_6, %c0_7] : memref<1x8x1xf32, #tpu.memory_space<vmem>>, vector<1x8x1xf32>
    %3 = vector.shape_cast %2 : vector<1x8x1xf32> to vector<1x8x1xf32>
    %4 = vector.broadcast %3 : vector<1x8x1xf32> to vector<1x8x256xf32>
    %c0_8 = arith.constant 0 : index
    %c4 = arith.constant 4 : index
    %c0_9 = arith.constant 0 : index
    %5 = vector.load %arg4[%c0_8, %c4, %c0_9] : memref<1x12x256xf32, #tpu.memory_space<vmem>>, vector<1x8x256xf32>
    tpu.vector_store %arg4[%c0_8, %c4, %c0_9], %4 {strides = array<i32>} : memref<1x12x256xf32, #tpu.memory_space<vmem>>, vector<1x8x256xf32>,
    return
  }
  func.func @transform_0(%arg0: i32, %arg1: i32) -> (i32, i32, i32) {
    %c0_i32 = arith.constant 0 : i32
    %c0_i32_0 = arith.constant 0 : i32
    return %arg0, %c0_i32, %arg1 : i32, i32, i32
  }
  func.func @transform_1(%arg0: i32, %arg1: i32) -> (i32, i32, i32) {
    %c0_i32 = arith.constant 0 : i32
    %c0_i32_0 = arith.constant 0 : i32
    %c0_i32_1 = arith.constant 0 : i32
    return %arg0, %c0_i32, %c0_i32_0 : i32, i32, i32
  }
  func.func @transform_2(%arg0: i32, %arg1: i32) -> (i32, i32, i32) {
    %c0_i32 = arith.constant 0 : i32
    %c0_i32_0 = arith.constant 0 : i32
    return %arg0, %c0_i32, %arg1 : i32, i32, i32
  }
}

</mosaic_0001>

<llo_original>
// kernel: tpu_custom_call.1
$region0: #{tpu_custom_call.1}
  #allocation0 [shape = 'u32[]', space=smem, size = 0x4, offset = 0x4, fixed_abs, tag = 'smem constant byte address 0x4 - core index']
  #allocation1 [shape = 'u32[144,128]{1,0:T(1,128)}', space=vmem, size = 0x12000, scoped, tag = 'internal scratch']
  %s0 = inlined_call_operand.vmem [shape: f32[2,4,256], index: 0, kind: input, shape index: {}]
  %s1 = inlined_call_operand.vmem [shape: f32[2,8,1], index: 1, kind: input, shape index: {}]
  %s2 = inlined_call_operand.vmem [shape: f32[2,12,256], index: 2, kind: output, shape index: {}]
  %s3 = sld [smem:[#allocation0]]
  $region41: #{tpu_custom_call.1} parent=0
    _
  %s5 = ssub.s32 1, %s3
  %s6 = scalar_select 0, %s5, %s3
  loop: start=0, step=1, limit=4
  $region2: #{tpu_custom_call.1} parent=0 // loop_pre_header
    _
  $region3: #{tpu_custom_call.1} parent=0 // loop_header
    %s8 = sphi 0, %s12
    %p9 = scmp.ge.s32.totalorder %s8, 4
    %s15 = sphi 0, %s27
    %s16 = sphi 0, %s23
    %s17 = sphi 0, %s15
    %s18 = sphi 0, %s16
    %s19 = sphi 0, %s17
    %s20 = sphi 0, %s18
    %s32 = sphi 0, %s34
    %s35 = sphi 0, %s32
    %s36 = sphi 0, %s35
    %s52 = sphi 0, %s36
    %s58 = sphi 0, %s60
    %s61 = sphi 0, %s58
    %s62 = sphi 0, %s61
    %s78 = sphi 0, %s62
    %s86 = sphi 0, %s88
    %s89 = sphi 0, %s86
    %s90 = sphi 0, %s89
    %s106 = sphi 0, %s90
  $region4: #{tpu_custom_call.1} parent=0 // loop_header_branch
    %11 = sbr.rel (%p9) target = $region8
  $region5: #{tpu_custom_call.1} parent=0 // loop_body
    %s13 = ssub.s32 %s8, 1
    %s14 = ssub.s32 %s8, 2
    %s21 = sadd.s32 1, %s16
    %p22 = scmp.ge.s32.totalorder %s21, 1
    %s23 = scalar_select %p22, 0, %s21
    %s24 = sadd.s32 1, %s15
    %s25 = scalar_select %p22, %s24, %s15
    %p26 = scmp.ge.s32.totalorder %s25, 2
    %s27 = scalar_select %p26, 0, %s25
    %s28 = ssub.s32 %s15, %s27
    %s29 = ssub.s32 %s16, %s23
    %s30 = sor.u32 %s28, %s29
    %p31 = scmp.eq.s32.totalorder %s30, 0
    %s33 = sadd.s32 %s32, 1
    %s34 = scalar_select %p31, %s32, %s33
    %p37 = pneg %p31
    %p38 = scmp.eq.s32.totalorder %s8, 1
    %p39 = por %p37, %p38
    %p40 = scmp.ne.s32.totalorder %s32, %s35
    %p41 = scmp.eq.s32.totalorder %s8, 0
    %p42 = por %p40, %p41
    %p43 = scmp.ne.s32.totalorder %s32, %s35
    %p44 = scmp.eq.s32.totalorder %s13, 1
    %p45 = por %p43, %p44
    %p46 = scmp.ne.s32.totalorder %s35, %s36
    %p47 = scmp.eq.s32.totalorder %s13, 0
    %p48 = por %p46, %p47
    %p49 = scmp.ne.s32.totalorder %s35, %s36
    %p50 = scmp.eq.s32.totalorder %s14, 1
    %p51 = por %p49, %p50
    %p53 = scmp.ne.s32.totalorder %s36, %s52
    %p54 = scmp.eq.s32.totalorder %s14, 0
    %p55 = por %p53, %p54
    %s56 = ssub.s32 %s15, %s27
    %p57 = scmp.eq.s32.totalorder %s56, 0
    %s59 = sadd.s32 %s58, 1
    %s60 = scalar_select %p57, %s58, %s59
    %p63 = pneg %p57
    %p64 = scmp.eq.s32.totalorder %s8, 1
    %p65 = por %p63, %p64
    %p66 = scmp.ne.s32.totalorder %s58, %s61
    %p67 = scmp.eq.s32.totalorder %s8, 0
    %p68 = por %p66, %p67
    %p69 = scmp.ne.s32.totalorder %s58, %s61
    %p70 = scmp.eq.s32.totalorder %s13, 1
    %p71 = por %p69, %p70
    %p72 = scmp.ne.s32.totalorder %s61, %s62
    %p73 = scmp.eq.s32.totalorder %s13, 0
    %p74 = por %p72, %p73
    %p75 = scmp.ne.s32.totalorder %s61, %s62
    %p76 = scmp.eq.s32.totalorder %s14, 1
    %p77 = por %p75, %p76
    %p79 = scmp.ne.s32.totalorder %s62, %s78
    %p80 = scmp.eq.s32.totalorder %s14, 0
    %p81 = por %p79, %p80
    %s82 = ssub.s32 %s15, %s27
    %s83 = ssub.s32 %s16, %s23
    %s84 = sor.u32 %s82, %s83
    %p85 = scmp.eq.s32.totalorder %s84, 0
    %s87 = sadd.s32 %s86, 1
    %s88 = scalar_select %p85, %s86, %s87
    %p91 = pneg %p85
    %p92 = scmp.eq.s32.totalorder %s8, 1
    %p93 = por %p91, %p92
    %p94 = scmp.ne.s32.totalorder %s86, %s89
    %p95 = scmp.eq.s32.totalorder %s8, 0
    %p96 = por %p94, %p95
    %p97 = scmp.ne.s32.totalorder %s86, %s89
    %p98 = scmp.eq.s32.totalorder %s13, 1
    %p99 = por %p97, %p98
    %p100 = scmp.ne.s32.totalorder %s89, %s90
    %p101 = scmp.eq.s32.totalorder %s13, 0
    %p102 = por %p100, %p101
    %p103 = scmp.ne.s32.totalorder %s89, %s90
    %p104 = scmp.eq.s32.totalorder %s14, 1
    %p105 = por %p103, %p104
    %p107 = scmp.ne.s32.totalorder %s90, %s106
    %p108 = scmp.eq.s32.totalorder %s14, 0
    %p109 = por %p107, %p108
    %p110 = scmp.le.s32.totalorder 1, %s8
    %p111 = scmp.lt.s32.totalorder %s8, 3
    %p112 = pnand %p110, %p111
    %p113 = pneg %p112
    // Predicated region
    $region9: #{tpu_custom_call.1} parent=5 // pred_check
      _
    $region10: #{tpu_custom_call.1} parent=5 // pred_check_branch
      %115 = sbr.rel (%p112) target = $region12
    $region11: #{tpu_custom_call.1} parent=5 // pred_region
      %s116 = ssub.s32 %s8, 1
    $region12: #{tpu_custom_call.1} parent=5 // pred_fallthru
      _
    %p117 = scmp.lt.s32.totalorder %s8, 2
    // Predicated region
    $region13: #{tpu_custom_call.1} parent=5 // pred_check
      %p118 = pneg %p117
    $region14: #{tpu_custom_call.1} parent=5 // pred_check_branch
      %120 = sbr.rel (%p118) target = $region16
    $region15: #{tpu_custom_call.1} parent=5 // pred_region
      // Predicated region
      $region17: #{tpu_custom_call.1} parent=15 // pred_check
        %p121 = pneg %p42
      $region18: #{tpu_custom_call.1} parent=15 // pred_check_branch
        %123 = sbr.rel (%p121) target = $region20
      $region19: #{tpu_custom_call.1} parent=15 // pred_region
        %s124 = smul.u32 2, %s16
        %p125 = scmp.lt.s32.totalorder %s15, 1
        %s126 = scalar_select %p125, %s15, 1
        %p127 = scmp.lt.s32.totalorder %s124, 1
        %s128 = scalar_select %p127, %s124, 1
        %s129 = smul.addr %s126, 2
        %s130 = sadd.s32 %s128, %s129
        %s131 = smul.addr %s130, 4
        %s132 = scalar_lea.vmem %s0, %s131
        %s133 = smul.u32 2, %s16
      $region20: #{tpu_custom_call.1} parent=15 // pred_fallthru
        _
      // Predicated region
      $region21: #{tpu_custom_call.1} parent=15 // pred_check
        %p134 = pneg %p68
      $region22: #{tpu_custom_call.1} parent=15 // pred_check_branch
        %136 = sbr.rel (%p134) target = $region24
      $region23: #{tpu_custom_call.1} parent=15 // pred_region
        %p137 = scmp.lt.s32.totalorder %s15, 1
        %s138 = scalar_select %p137, %s15, 1
        %s139 = smul.addr %s138, 8
        %s140 = scalar_lea.vmem %s1, %s139
      $region24: #{tpu_custom_call.1} parent=15 // pred_fallthru
        _
    $region16: #{tpu_custom_call.1} parent=5 // pred_fallthru
      _
    %p141 = scmp.le.s32.totalorder 1, %s8
    %p142 = scmp.lt.s32.totalorder %s8, 3
    %p143 = pnand %p141, %p142
    %p144 = pneg %p143
    // Predicated region
    $region25: #{tpu_custom_call.1} parent=5 // pred_check
      _
    $region26: #{tpu_custom_call.1} parent=5 // pred_check_branch
      %146 = sbr.rel (%p143) target = $region28
    $region27: #{tpu_custom_call.1} parent=5 // pred_region
      %s147 = ssub.s32 %s8, 1
      %s148 = smul.u32 2, %s18
      %p149 = scmp.lt.s32.totalorder %s17, 1
      %s150 = scalar_select %p149, %s17, 1
      %p151 = scmp.lt.s32.totalorder %s148, 1
      %s152 = scalar_select %p151, %s148, 1
      %s153 = smul.addr %s150, 2
      %s154 = sadd.s32 %s152, %s153
      %s155 = smul.addr %s154, 4
      %s156 = scalar_lea.vmem %s0, %s155
      %p157 = pneg %p48
      %p158 = pneg %p45
      %p159 = scmp.lt.s32.totalorder %s17, 1
      %s160 = scalar_select %p159, %s17, 1
      %s161 = smul.addr %s160, 8
      %s162 = scalar_lea.vmem %s1, %s161
      %p163 = pneg %p74
      %p164 = pneg %p71
      %p165 = pneg %p102
      %p166 = pneg %p99
      %s167 = smul.u32 2, %s18
      %p168 = scmp.lt.s32.totalorder %s17, 1
      %s169 = scalar_select %p168, %s17, 1
      %p170 = scmp.lt.s32.totalorder %s167, 1
      %s171 = scalar_select %p170, %s167, 1
      %s172 = smul.addr %s169, 4
      %s173 = sadd.s32 %s171, %s172
      %s174 = smul.addr %s173, 8
      %s175 = scalar_lea.vmem %s2, %s174
      %s176 = smul.u32 2, %s18
      %p177 = scmp.lt.s32.totalorder %s17, 1
      %s178 = scalar_select %p177, %s17, 1
      %p179 = scmp.lt.s32.totalorder %s176, 1
      %s180 = scalar_select %p179, %s176, 1
      %s181 = smul.addr %s178, 2
      %s182 = sadd.s32 %s180, %s181
      %s183 = smul.addr %s182, 4
      %s184 = scalar_lea.vmem %s0, %s183
      %s185 = smul.u32 2, %s18
      %p186 = scmp.lt.s32.totalorder %s17, 1
      %s187 = scalar_select %p186, %s17, 1
      %s188 = smul.addr %s187, 8
      %s189 = scalar_lea.vmem %s1, %s188
      %s190 = smul.u32 2, %s18
      %p191 = scmp.lt.s32.totalorder %s17, 1
      %s192 = scalar_select %p191, %s17, 1
      %p193 = scmp.lt.s32.totalorder %s190, 1
      %s194 = scalar_select %p193, %s190, 1
      %s195 = smul.addr %s192, 4
      %s196 = sadd.s32 %s194, %s195
      %s197 = smul.addr %s196, 8
      %s198 = scalar_lea.vmem %s2, %s197
      %s199 = smul.u32 2, %s18
      %v200 = vld [vmem:[%s184] sm:$0xff]
      %v202 = vcombine.high %v200, %v200
      %204 = vst [vmem:[%s198] sm:$0xf] %v200
      %205 = vst [vmem:[%s198 + $0x8] sm:$0xf] %v202
      %v206 = vld [vmem:[%s189] sm:$0xff]
      %208 = vset.pattern.permute.xlu0 0
      %209 = vperm.xlu0 %208, %v206
      %v210 = vpop.permute.xlu0 %209
      %v211 = vrot.slane %v210, 4
      %213 = vst [vmem:[%s198] sm:$0xf0] %v211
      %214 = vst [vmem:[%s198 + $0x8] sm:$0xf0] %v211
      %215 = vst [vmem:[%s198 + $0x10] sm:$0xf] %v211
      %216 = vst [vmem:[%s198 + $0x18] sm:$0xf] %v211
      %s217 = smul.u32 2, %s18
      %p218 = scmp.lt.s32.totalorder %s17, 1
      %s219 = scalar_select %p218, %s17, 1
      %p220 = scmp.lt.s32.totalorder %s217, 1
      %s221 = scalar_select %p220, %s217, 1
      %s222 = smul.addr %s219, 4
      %s223 = sadd.s32 %s221, %s222
      %s224 = smul.addr %s223, 8
      %s225 = scalar_lea.vmem %s2, %s224
      // Predicated region
      $region29: #{tpu_custom_call.1} parent=27 // pred_check
        %p226 = pneg %p99
      $region30: #{tpu_custom_call.1} parent=27 // pred_check_branch
        %228 = sbr.rel (%p226) target = $region32
      $region31: #{tpu_custom_call.1} parent=27 // pred_region
        %s229 = smul.u32 2, %s18
      $region32: #{tpu_custom_call.1} parent=27 // pred_fallthru
        _
    $region28: #{tpu_custom_call.1} parent=5 // pred_fallthru
      _
    %p230 = scmp.le.s32.totalorder 2, %s8
    // Predicated region
    $region33: #{tpu_custom_call.1} parent=5 // pred_check
      %p231 = pneg %p230
    $region34: #{tpu_custom_call.1} parent=5 // pred_check_branch
      %233 = sbr.rel (%p231) target = $region36
    $region35: #{tpu_custom_call.1} parent=5 // pred_region
      %s234 = ssub.s32 %s8, 2
      // Predicated region
      $region37: #{tpu_custom_call.1} parent=35 // pred_check
        %p235 = pneg %p105
      $region38: #{tpu_custom_call.1} parent=35 // pred_check_branch
        %237 = sbr.rel (%p235) target = $region40
      $region39: #{tpu_custom_call.1} parent=35 // pred_region
        %s238 = smul.u32 2, %s20
        %p239 = scmp.lt.s32.totalorder %s19, 1
        %s240 = scalar_select %p239, %s19, 1
        %p241 = scmp.lt.s32.totalorder %s238, 1
        %s242 = scalar_select %p241, %s238, 1
        %s243 = smul.addr %s240, 4
        %s244 = sadd.s32 %s242, %s243
        %s245 = smul.addr %s244, 8
        %s246 = scalar_lea.vmem %s2, %s245
      $region40: #{tpu_custom_call.1} parent=35 // pred_fallthru
        _
    $region36: #{tpu_custom_call.1} parent=5 // pred_fallthru
      _
  $region6: #{tpu_custom_call.1} parent=0 // loop_footer
    %s12 = sadd.s32 1, %s8
  $region7: #{tpu_custom_call.1} parent=0 // loop_footer_branch
    %7 = sbr.rel target = $region3
  $region8: #{tpu_custom_call.1} parent=0 // loop_exit
    _

</llo_original>
